<compile_context>
chip_gen: v6e
topology: v6e:2x2x1
jax: 0.10.0
libtpu: 0.0.40
codegen_flags: <defaults>
</compile_context>

<pallas_src>
import functools

import jax
import jax.numpy as jnp
from jax.experimental import pallas as pl
from jax.experimental.pallas import tpu as pltpu


def _round_up(x, m):
    return ((x + m - 1) // m) * m


_SENTINEL = 2.0                                   # prob written for ignored / padded pixels
_TINY = float(jnp.finfo(jnp.float32).tiny)        # smallest normal f32 (TPU flushes denormals)
_VMEM_LIMIT = 40 * 1024 * 1024                    # safe on v5e/v6e (128 MiB) and v7x (64 MiB)


# ----------------------------------------------------------------------------
# Kernel 1: per-pixel true-class softmax prob (classes on sublanes, pixels on
# lanes; reads the NCHW score tensor in place).
# ----------------------------------------------------------------------------
def _ce_prob_kernel(score_ref, tgt_ref, prob_ref, *, ignore_label, hw):
    # score_ref: (1, C, TPx) logits (native dtype)
    # tgt_ref  : (1, 1, TPx) int32 labels
    # prob_ref : (1, 1, TPx) f32 true-class prob; sentinel 2.0 for ignored/pad
    logits = score_ref[0].astype(jnp.float32)                 # (C, TPx)
    tgt = tgt_ref[0]                                          # (1, TPx)
    tpx = tgt.shape[-1]

    # Mask lanes past the real per-image pixel count (partial last block).
    j = pl.program_id(1)
    pix = j * tpx + jax.lax.broadcasted_iota(jnp.int32, (1, tpx), 1)
    valid = (tgt != ignore_label) & (pix < hw)                # (1, TPx)
    tgt_c = jnp.where(valid, tgt, 0)

    m = jnp.max(logits, axis=0, keepdims=True)                # sublane (XLU) reduce
    z = logits - m
    lse = jnp.log(jnp.sum(jnp.exp(z), axis=0, keepdims=True))  # (1, TPx)

    # Select z at the target class with a single vselect (no onehot multiply).
    classes = jax.lax.broadcasted_iota(jnp.int32, logits.shape, 0)
    z_t = jnp.sum(jnp.where(classes == tgt_c, z, 0.0), axis=0, keepdims=True)

    logp_t = z_t - lse                                        # log softmax @ target
    prob_ref[0] = jnp.where(valid, jnp.exp(logp_t), _SENTINEL)


# ----------------------------------------------------------------------------
# Kernel 2: streaming OHEM statistics (purely parallel grid, narrow outputs).
# Uses the STATIC thresh; the dynamic-threshold case is handled by the rare
# XLA fallback branch in the wrapper.
# ----------------------------------------------------------------------------
def _ohem_stats_kernel(prob_ref, sum_ref, keep_ref, le_ref, valid_ref,
                       *, thresh, tot_rows):
    # prob_ref : (SB, 128) f32 probs (sentinel 2.0 for ignored/padded pixels)
    # outputs  : (1, 1, 128) per-lane partials for this block
    prob = prob_ref[...]
    sb = prob.shape[0]
    rows = pl.program_id(0) * sb + jax.lax.broadcasted_iota(jnp.int32, prob.shape, 0)
    inb = rows < tot_rows                         # mask partial last block

    keep = inb & (prob < thresh)                  # hard pixels (threshold == thresh)
    le = inb & (prob <= thresh)                   # gate count for the k-th-value test
    validp = inb & (prob <= 1.5)                  # real (non-ignored) pixels

    loss = -jnp.log(jnp.maximum(prob, _TINY))     # EUP; masked where not kept

    sum_ref[0] = jnp.sum(jnp.where(keep, loss, 0.0), axis=0, keepdims=True)
    keep_ref[0] = jnp.sum(keep.astype(jnp.float32), axis=0, keepdims=True)
    le_ref[0] = jnp.sum(le.astype(jnp.float32), axis=0, keepdims=True)
    valid_ref[0] = jnp.sum(validp.astype(jnp.float32), axis=0, keepdims=True)


# ----------------------------------------------------------------------------
# Module wrapper
# ----------------------------------------------------------------------------
class OhemCrossEntropy:
    def __init__(self, ignore_label=-1, thres=0.7, min_kept=100000, weight=None):
        # weight=None in the reference config; no per-class weighting implemented.
        assert weight is None
        self.thresh = float(thres)
        self.min_kept = max(1, int(min_kept))
        self.ignore_label = int(ignore_label)

    def __call__(self, score, target):
        N, C, ph, pw = score.shape
        _, h, w = target.shape
        if (ph, pw) != (h, w):
            # TODO(synk): fuse the bilinear upsample into kernel 1 (read low-res
            # tile + halo, interpolate in-kernel) to avoid materializing the
            # full-res logits in HBM; jax.image.resize also only approximates
            # F.upsample(mode='bilinear') align_corners semantics.
            score = jax.image.resize(score, (N, C, h, w),
                                     method="bilinear").astype(score.dtype)

        HW = h * w
        # Free reshapes only: score keeps NCHW order and its native dtype.
        score_r = score.reshape(N, C, HW)
        tgt_r = target.reshape(N, 1, HW).astype(jnp.int32)

        # ---- kernel-1 pixel-tile size from an explicit VMEM budget ----------
        # double-buffered I/O blocks + ~8 f32 (C,TPx) elementwise temporaries
        itemsize = jnp.dtype(score.dtype).itemsize
        bytes_per_px = 2 * C * itemsize + 16 + 8 * C * 4
        tpx_max = int(max(128, min(32 * 1024,
                                   (24 * 1024 * 1024 // bytes_per_px) // 128 * 128)))

        hw128 = _round_up(HW, 128)
        if hw128 != HW and hw128 <= tpx_max:
            # Small, non-128-multiple spatial size: pad the (tiny) tensors.
            pad = hw128 - HW
            score_r = jnp.pad(score_r, ((0, 0), (0, 0), (0, pad)))
            tgt_r = jnp.pad(tgt_r, ((0, 0), (0, 0), (0, pad)),
                            constant_values=self.ignore_label)
            HW_in = hw128
        else:
            HW_in = HW                           # large case: mask in-kernel instead
        TPx = min(tpx_max, hw128)
        nblk = (HW_in + TPx - 1) // TPx
        L = nblk * TPx                           # padded per-image pixel count

        # --- Kernel 1: per-pixel true-class prob (lane-dense) ----------------
        kern1 = functools.partial(_ce_prob_kernel,
                                  ignore_label=self.ignore_label, hw=HW)
        prob = pl.pallas_call(
            kern1,
            out_shape=jax.ShapeDtypeStruct((N, 1, L), jnp.float32),
            grid_spec=pltpu.PrefetchScalarGridSpec(
                num_scalar_prefetch=0,
                grid=(N, nblk),
                in_specs=[pl.BlockSpec((1, C, TPx), lambda n, j: (n, 0, j)),
                          pl.BlockSpec((1, 1, TPx), lambda n, j: (n, 0, j))],
                out_specs=pl.BlockSpec((1, 1, TPx), lambda n, j: (n, 0, j))),
            compiler_params=pltpu.CompilerParams(
                dimension_semantics=("parallel", "parallel"),
                vmem_limit_bytes=_VMEM_LIMIT),
        )(score_r, tgt_r)

        # --- Kernel 2: streaming OHEM stats over a free (rows, 128) view -----
        TOT_R = (N * L) // 128
        prob2d = prob.reshape(TOT_R, 128)        # free reshape (row-major)
        SB = TOT_R if TOT_R <= 4096 else 4096    # ~2 MiB f32 input blocks
        nblocks = (TOT_R + SB - 1) // SB

        kern2 = functools.partial(_ohem_stats_kernel,
                                  thresh=self.thresh, tot_rows=TOT_R)
        stat_sds = jax.ShapeDtypeStruct((nblocks, 1, 128), jnp.float32)
        stat_spec = pl.BlockSpec((1, 1, 128), lambda b: (b, 0, 0))
        sum_p, keep_p, le_p, valid_p = pl.pallas_call(
            kern2,
            out_shape=(stat_sds, stat_sds, stat_sds, stat_sds),
            grid_spec=pltpu.PrefetchScalarGridSpec(
                num_scalar_prefetch=0,
                grid=(nblocks,),
                in_specs=[pl.BlockSpec((SB, 128), lambda b: (b, 0))],
                out_specs=[stat_spec, stat_spec, stat_spec, stat_spec]),
            compiler_params=pltpu.CompilerParams(
                dimension_semantics=("parallel",),
                vmem_limit_bytes=_VMEM_LIMIT),
        )(prob2d)

        sum_keep = jnp.sum(sum_p)
        cnt_keep = jnp.sum(keep_p)
        cnt_le = jnp.sum(le_p)
        n_valid = jnp.sum(valid_p).astype(jnp.int32)

        # --- OHEM threshold with a sort gate ----------------------------------
        # k-th smallest valid prob is <= thresh  <=>  cnt_le >= k + 1; in that
        # (common) case threshold == thresh exactly and kernel 2 already holds
        # the answer.  Only otherwise do we pay for the exact k-th-value sort.
        total = N * L
        k = jnp.clip(jnp.minimum(jnp.int32(self.min_kept), n_valid - 1),
                     0, total - 1)
        gate = cnt_le.astype(jnp.int32) > k

        def _easy():
            return jnp.where(cnt_keep > 0.0,
                             sum_keep / jnp.maximum(cnt_keep, 1.0),
                             jnp.float32(0.0))

        def _hard():
            # TODO(synk): torch.sort has no Pallas TPU equivalent; the exact
            # k-th-value selection stays in XLA but only runs on this rare path.
            pf = prob.reshape(-1)                # ignored/padded pixels carry 2.0
            min_value = jnp.take(jnp.sort(pf), k)
            threshold = jnp.maximum(min_value, jnp.float32(self.thresh))
            kept = pf < threshold                # sentinel 2.0 never kept
            loss = -jnp.log(jnp.maximum(pf, _TINY))
            s = jnp.sum(jnp.where(kept, loss, 0.0))
            c = jnp.sum(kept.astype(jnp.float32))
            return jnp.where(c > 0.0, s / jnp.maximum(c, 1.0), jnp.float32(0.0))

        return jax.lax.cond(gate, _easy, _hard)


# ----------------------------------------------------------------------------
# Pure-JAX reference (mirrors the PyTorch forward semantics)
# ----------------------------------------------------------------------------
def _reference(score, target, ignore_label, thres, min_kept):
    N, C, H, W = score.shape
    logits = jnp.transpose(score, (0, 2, 3, 1)).reshape(-1, C).astype(jnp.float32)
    tgt = target.reshape(-1).astype(jnp.int32)
    valid = tgt != ignore_label
    tgt_c = jnp.where(valid, tgt, 0)
    logp = jax.nn.log_softmax(logits, axis=-1)
    logp_t = jnp.take_along_axis(logp, tgt_c[:, None], axis=-1)[:, 0]
    loss = -logp_t
    prob = jnp.exp(logp_t)
    n_valid = jnp.sum(valid.astype(jnp.int32))
    sorted_prob = jnp.sort(jnp.where(valid, prob, 2.0))
    k = jnp.minimum(jnp.int32(min_kept), n_valid - 1)
    min_value = jnp.take(sorted_prob, k)
    threshold = jnp.maximum(min_value, jnp.float32(thres))
    keep = valid & (prob < threshold)
    keep_f = keep.astype(jnp.float32)
    return jnp.sum(loss * keep_f) / jnp.sum(keep_f)


if __name__ == "__main__":
    key = jax.random.PRNGKey(0)
    k1, k2 = jax.random.split(key)

    N, C, H, W = 2, 4, 16, 16
    ignore_label = -1

    score = jax.random.normal(k1, (N, C, H, W), dtype=jnp.float32) * 2.0
    # targets in [-1, C): some pixels carry the ignore_label
    target = jax.random.randint(k2, (N, H, W), minval=-1, maxval=C, dtype=jnp.int32)

    # Case 1: plenty of hard pixels -> gate passes, no sort runs.
    ohem_a = OhemCrossEntropy(ignore_label=ignore_label, thres=0.7, min_kept=50)
    fn_a = jax.jit(lambda s, t: ohem_a(s, t))
    out_a = jax.block_until_ready(fn_a(score, target))
    ref_a = jax.block_until_ready(_reference(score, target, ignore_label, 0.7, 50))
    assert jnp.isfinite(out_a), "kernel produced non-finite loss (case A)"
    assert abs(float(out_a) - float(ref_a)) < 1e-4, (float(out_a), float(ref_a))

    # Case 2: min_kept larger than the hard-pixel count -> exercises the
    # sort fallback branch.
    ohem_b = OhemCrossEntropy(ignore_label=ignore_label, thres=0.7, min_kept=100000)
    fn_b = jax.jit(lambda s, t: ohem_b(s, t))
    out_b = jax.block_until_ready(fn_b(score, target))
    ref_b = jax.block_until_ready(_reference(score, target, ignore_label, 0.7, 100000))
    assert jnp.isfinite(out_b), "kernel produced non-finite loss (case B)"
    assert abs(float(out_b) - float(ref_b)) < 1e-4, (float(out_b), float(ref_b))

    print("KERNEL_OK")
</pallas_src>

<mosaic_0001>
module attributes {stable_mosaic.version = 11 : i64} {
  func.func @_ce_prob_kernel(%arg0: i32, %arg1: i32, %arg2: memref<1x4x256xf32, #tpu.memory_space<vmem>>, %arg3: memref<1x1x256xi32, #tpu.memory_space<vmem>>, %arg4: memref<1x1x256xf32, #tpu.memory_space<vmem>>) attributes {dimension_semantics = [#tpu.dimension_semantics<parallel>, #tpu.dimension_semantics<parallel>], iteration_bounds = array<i64: 2, 1>, scalar_prefetch = 0 : i64, scratch_operands = 0 : i64, tpu.core_type = #tpu.core_type<tc>, window_params = [{transform_indices = @transform_0, window_bounds = array<i64: 1, 4, 256>}, {transform_indices = @transform_1, window_bounds = array<i64: 1, 1, 256>}, {transform_indices = @transform_2, window_bounds = array<i64: 1, 1, 256>}]} {
    %c0 = arith.constant 0 : index
    %c0_0 = arith.constant 0 : index
    %c0_1 = arith.constant 0 : index
    %0 = vector.load %arg2[%c0, %c0_0, %c0_1] : memref<1x4x256xf32, #tpu.memory_space<vmem>>, vector<1x4x256xf32>
    %1 = vector.shape_cast %0 : vector<1x4x256xf32> to vector<4x256xf32>
    %c0_2 = arith.constant 0 : index
    %c0_3 = arith.constant 0 : index
    %c0_4 = arith.constant 0 : index
    %2 = vector.load %arg3[%c0_2, %c0_3, %c0_4] : memref<1x1x256xi32, #tpu.memory_space<vmem>>, vector<1x1x256xi32>
    %3 = vector.shape_cast %2 : vector<1x1x256xi32> to vector<1x256xi32>
    %c256_i32 = arith.constant 256 : i32
    %4 = arith.muli %arg1, %c256_i32 : i32
    %5 = tpu.iota {dimensions = array<i32: 1>} : vector<1x256xi32>
    %6 = vector.broadcast %4 : i32 to vector<1x256xi32>
    %7 = arith.addi %6, %5 : vector<1x256xi32>
    %c-1_i32 = arith.constant -1 : i32
    %8 = vector.broadcast %c-1_i32 : i32 to vector<1x256xi32>
    %9 = arith.cmpi ne, %3, %8 : vector<1x256xi32>
    %c256_i32_5 = arith.constant 256 : i32
    %10 = vector.broadcast %c256_i32_5 : i32 to vector<1x256xi32>
    %11 = arith.cmpi slt, %7, %10 : vector<1x256xi32>
    %12 = arith.andi %9, %11 : vector<1x256xi1>
    %c0_i32 = arith.constant 0 : i32
    %13 = vector.broadcast %c0_i32 : i32 to vector<1x256xi32>
    %14 = arith.select %12, %3, %13 : vector<1x256xi1>, vector<1x256xi32>
    %cst = arith.constant dense<0xFF800000> : vector<256xf32>
    %15 = vector.multi_reduction <maximumf>, %1, %cst [0] : vector<4x256xf32> to vector<256xf32>
    %16 = vector.shape_cast %15 : vector<256xf32> to vector<1x256xf32>
    %17 = vector.broadcast %16 : vector<1x256xf32> to vector<4x256xf32>
    %18 = arith.subf %1, %17 : vector<4x256xf32>
    %19 = math.exp %18 : vector<4x256xf32>
    %cst_6 = arith.constant dense<0.000000e+00> : vector<256xf32>
    %20 = vector.multi_reduction <add>, %19, %cst_6 [0] : vector<4x256xf32> to vector<256xf32>
    %21 = vector.shape_cast %20 : vector<256xf32> to vector<1x256xf32>
    %22 = math.log %21 : vector<1x256xf32>
    %23 = tpu.iota {dimensions = array<i32: 0>} : vector<4x256xi32>
    %24 = vector.broadcast %14 : vector<1x256xi32> to vector<4x256xi32>
    %25 = arith.cmpi eq, %23, %24 : vector<4x256xi32>
    %cst_7 = arith.constant 0.000000e+00 : f32
    %26 = vector.broadcast %cst_7 : f32 to vector<4x256xf32>
    %27 = arith.select %25, %18, %26 : vector<4x256xi1>, vector<4x256xf32>
    %cst_8 = arith.constant dense<0.000000e+00> : vector<256xf32>
    %28 = vector.multi_reduction <add>, %27, %cst_8 [0] : vector<4x256xf32> to vector<256xf32>
    %29 = vector.shape_cast %28 : vector<256xf32> to vector<1x256xf32>
    %30 = arith.subf %29, %22 : vector<1x256xf32>
    %31 = math.exp %30 : vector<1x256xf32>
    %cst_9 = arith.constant 2.000000e+00 : f32
    %32 = vector.broadcast %cst_9 : f32 to vector<1x256xf32>
    %33 = arith.select %12, %31, %32 : vector<1x256xi1>, vector<1x256xf32>
    %c0_10 = arith.constant 0 : index
    %c0_11 = arith.constant 0 : index
    %c0_12 = arith.constant 0 : index
    %34 = vector.load %arg4[%c0_10, %c0_11, %c0_12] : memref<1x1x256xf32, #tpu.memory_space<vmem>>, vector<1x1x256xf32>
    %35 = vector.shape_cast %34 : vector<1x1x256xf32> to vector<1x256xf32>
    %36 = vector.shape_cast %33 : vector<1x256xf32> to vector<1x1x256xf32>
    tpu.vector_store %arg4[%c0_10, %c0_11, %c0_12], %36 {strides = array<i32>} : memref<1x1x256xf32, #tpu.memory_space<vmem>>, vector<1x1x256xf32>,
    return
  }
  func.func @transform_0(%arg0: i32, %arg1: i32) -> (i32, i32, i32) {
    %c0_i32 = arith.constant 0 : i32
    %c0_i32_0 = arith.constant 0 : i32
    return %arg0, %c0_i32, %arg1 : i32, i32, i32
  }
  func.func @transform_1(%arg0: i32, %arg1: i32) -> (i32, i32, i32) {
    %c0_i32 = arith.constant 0 : i32
    %c0_i32_0 = arith.constant 0 : i32
    return %arg0, %c0_i32, %arg1 : i32, i32, i32
  }
  func.func @transform_2(%arg0: i32, %arg1: i32) -> (i32, i32, i32) {
    %c0_i32 = arith.constant 0 : i32
    %c0_i32_0 = arith.constant 0 : i32
    return %arg0, %c0_i32, %arg1 : i32, i32, i32
  }
}

module attributes {stable_mosaic.version = 11 : i64} {
  func.func @_ohem_stats_kernel(%arg0: i32, %arg1: memref<4x128xf32, #tpu.memory_space<vmem>>, %arg2: memref<1x1x128xf32, #tpu.memory_space<vmem>>, %arg3: memref<1x1x128xf32, #tpu.memory_space<vmem>>, %arg4: memref<1x1x128xf32, #tpu.memory_space<vmem>>, %arg5: memref<1x1x128xf32, #tpu.memory_space<vmem>>) attributes {dimension_semantics = [#tpu.dimension_semantics<parallel>], iteration_bounds = array<i64: 1>, scalar_prefetch = 0 : i64, scratch_operands = 0 : i64, tpu.core_type = #tpu.core_type<tc>, window_params = [{transform_indices = @transform_0, window_bounds = array<i64: 4, 128>}, {transform_indices = @transform_1, window_bounds = array<i64: 1, 1, 128>}, {transform_indices = @transform_2, window_bounds = array<i64: 1, 1, 128>}, {transform_indices = @transform_3, window_bounds = array<i64: 1, 1, 128>}, {transform_indices = @transform_4, window_bounds = array<i64: 1, 1, 128>}]} {
    %c0 = arith.constant 0 : index
    %c0_0 = arith.constant 0 : index
    %0 = vector.load %arg1[%c0, %c0_0] : memref<4x128xf32, #tpu.memory_space<vmem>>, vector<4x128xf32>
    %c4_i32 = arith.constant 4 : i32
    %1 = arith.muli %arg0, %c4_i32 : i32
    %2 = tpu.iota {dimensions = array<i32: 0>} : vector<4x128xi32>
    %3 = vector.broadcast %1 : i32 to vector<4x128xi32>
    %4 = arith.addi %3, %2 : vector<4x128xi32>
    %c4_i32_1 = arith.constant 4 : i32
    %5 = vector.broadcast %c4_i32_1 : i32 to vector<4x128xi32>
    %6 = arith.cmpi slt, %4, %5 : vector<4x128xi32>
    %cst = arith.constant 0.699999988 : f32
    %7 = vector.broadcast %cst : f32 to vector<4x128xf32>
    %8 = arith.cmpf olt, %0, %7 : vector<4x128xf32>
    %9 = arith.andi %6, %8 : vector<4x128xi1>
    %cst_2 = arith.constant 0.699999988 : f32
    %10 = vector.broadcast %cst_2 : f32 to vector<4x128xf32>
    %11 = arith.cmpf ole, %0, %10 : vector<4x128xf32>
    %12 = arith.andi %6, %11 : vector<4x128xi1>
    %cst_3 = arith.constant 1.500000e+00 : f32
    %13 = vector.broadcast %cst_3 : f32 to vector<4x128xf32>
    %14 = arith.cmpf ole, %0, %13 : vector<4x128xf32>
    %15 = arith.andi %6, %14 : vector<4x128xi1>
    %cst_4 = arith.constant 1.17549435E-38 : f32
    %16 = vector.broadcast %cst_4 : f32 to vector<4x128xf32>
    %17 = arith.maximumf %0, %16 : vector<4x128xf32>
    %18 = math.log %17 : vector<4x128xf32>
    %cst_5 = arith.constant 0.000000e+00 : f32
    %19 = vector.broadcast %cst_5 : f32 to vector<4x128xf32>
    %20 = arith.subf %19, %18 : vector<4x128xf32>
    %cst_6 = arith.constant 0.000000e+00 : f32
    %21 = vector.broadcast %cst_6 : f32 to vector<4x128xf32>
    %22 = arith.select %9, %20, %21 : vector<4x128xi1>, vector<4x128xf32>
    %cst_7 = arith.constant dense<0.000000e+00> : vector<128xf32>
    %23 = vector.multi_reduction <add>, %22, %cst_7 [0] : vector<4x128xf32> to vector<128xf32>
    %24 = vector.shape_cast %23 : vector<128xf32> to vector<1x128xf32>
    %c0_8 = arith.constant 0 : index
    %c0_9 = arith.constant 0 : index
    %c0_10 = arith.constant 0 : index
    %25 = vector.load %arg2[%c0_8, %c0_9, %c0_10] : memref<1x1x128xf32, #tpu.memory_space<vmem>>, vector<1x1x128xf32>
    %26 = vector.shape_cast %25 : vector<1x1x128xf32> to vector<1x128xf32>
    %27 = vector.shape_cast %24 : vector<1x128xf32> to vector<1x1x128xf32>
    tpu.vector_store %arg2[%c0_8, %c0_9, %c0_10], %27 {strides = array<i32>} : memref<1x1x128xf32, #tpu.memory_space<vmem>>, vector<1x1x128xf32>,
    %28 = arith.extui %9 : vector<4x128xi1> to vector<4x128xi32>
    %29 = arith.sitofp %28 : vector<4x128xi32> to vector<4x128xf32>
    %cst_11 = arith.constant dense<0.000000e+00> : vector<128xf32>
    %30 = vector.multi_reduction <add>, %29, %cst_11 [0] : vector<4x128xf32> to vector<128xf32>
    %31 = vector.shape_cast %30 : vector<128xf32> to vector<1x128xf32>
    %c0_12 = arith.constant 0 : index
    %c0_13 = arith.constant 0 : index
    %c0_14 = arith.constant 0 : index
    %32 = vector.load %arg3[%c0_12, %c0_13, %c0_14] : memref<1x1x128xf32, #tpu.memory_space<vmem>>, vector<1x1x128xf32>
    %33 = vector.shape_cast %32 : vector<1x1x128xf32> to vector<1x128xf32>
    %34 = vector.shape_cast %31 : vector<1x128xf32> to vector<1x1x128xf32>
    tpu.vector_store %arg3[%c0_12, %c0_13, %c0_14], %34 {strides = array<i32>} : memref<1x1x128xf32, #tpu.memory_space<vmem>>, vector<1x1x128xf32>,
    %35 = arith.extui %12 : vector<4x128xi1> to vector<4x128xi32>
    %36 = arith.sitofp %35 : vector<4x128xi32> to vector<4x128xf32>
    %cst_15 = arith.constant dense<0.000000e+00> : vector<128xf32>
    %37 = vector.multi_reduction <add>, %36, %cst_15 [0] : vector<4x128xf32> to vector<128xf32>
    %38 = vector.shape_cast %37 : vector<128xf32> to vector<1x128xf32>
    %c0_16 = arith.constant 0 : index
    %c0_17 = arith.constant 0 : index
    %c0_18 = arith.constant 0 : index
    %39 = vector.load %arg4[%c0_16, %c0_17, %c0_18] : memref<1x1x128xf32, #tpu.memory_space<vmem>>, vector<1x1x128xf32>
    %40 = vector.shape_cast %39 : vector<1x1x128xf32> to vector<1x128xf32>
    %41 = vector.shape_cast %38 : vector<1x128xf32> to vector<1x1x128xf32>
    tpu.vector_store %arg4[%c0_16, %c0_17, %c0_18], %41 {strides = array<i32>} : memref<1x1x128xf32, #tpu.memory_space<vmem>>, vector<1x1x128xf32>,
    %42 = arith.extui %15 : vector<4x128xi1> to vector<4x128xi32>
    %43 = arith.sitofp %42 : vector<4x128xi32> to vector<4x128xf32>
    %cst_19 = arith.constant dense<0.000000e+00> : vector<128xf32>
    %44 = vector.multi_reduction <add>, %43, %cst_19 [0] : vector<4x128xf32> to vector<128xf32>
    %45 = vector.shape_cast %44 : vector<128xf32> to vector<1x128xf32>
    %c0_20 = arith.constant 0 : index
    %c0_21 = arith.constant 0 : index
    %c0_22 = arith.constant 0 : index
    %46 = vector.load %arg5[%c0_20, %c0_21, %c0_22] : memref<1x1x128xf32, #tpu.memory_space<vmem>>, vector<1x1x128xf32>
    %47 = vector.shape_cast %46 : vector<1x1x128xf32> to vector<1x128xf32>
    %48 = vector.shape_cast %45 : vector<1x128xf32> to vector<1x1x128xf32>
    tpu.vector_store %arg5[%c0_20, %c0_21, %c0_22], %48 {strides = array<i32>} : memref<1x1x128xf32, #tpu.memory_space<vmem>>, vector<1x1x128xf32>,
    return
  }
  func.func @transform_0(%arg0: i32) -> (i32, i32) {
    %c0_i32 = arith.constant 0 : i32
    %c0_i32_0 = arith.constant 0 : i32
    return %arg0, %c0_i32 : i32, i32
  }
  func.func @transform_1(%arg0: i32) -> (i32, i32, i32) {
    %c0_i32 = arith.constant 0 : i32
    %c0_i32_0 = arith.constant 0 : i32
    %c0_i32_1 = arith.constant 0 : i32
    return %arg0, %c0_i32, %c0_i32_0 : i32, i32, i32
  }
  func.func @transform_2(%arg0: i32) -> (i32, i32, i32) {
    %c0_i32 = arith.constant 0 : i32
    %c0_i32_0 = arith.constant 0 : i32
    %c0_i32_1 = arith.constant 0 : i32
    return %arg0, %c0_i32, %c0_i32_0 : i32, i32, i32
  }
  func.func @transform_3(%arg0: i32) -> (i32, i32, i32) {
    %c0_i32 = arith.constant 0 : i32
    %c0_i32_0 = arith.constant 0 : i32
    %c0_i32_1 = arith.constant 0 : i32
    return %arg0, %c0_i32, %c0_i32_0 : i32, i32, i32
  }
  func.func @transform_4(%arg0: i32) -> (i32, i32, i32) {
    %c0_i32 = arith.constant 0 : i32
    %c0_i32_0 = arith.constant 0 : i32
    %c0_i32_1 = arith.constant 0 : i32
    return %arg0, %c0_i32, %c0_i32_0 : i32, i32, i32
  }
}

</mosaic_0001>

<llo_original>
// kernel: _lambda_.2
$region0: #{_lambda_.2}
  #allocation0 [shape = 'u32[]', space=smem, size = 0x4, offset = 0x4, fixed_abs, tag = 'smem constant byte address 0x4 - core index']
  #allocation1 [shape = 'u32[144,128]{1,0:T(1,128)}', space=vmem, size = 0x12000, scoped, tag = 'internal scratch']
  %s0 = inlined_call_operand.vmem [shape: f32[2,4,256], index: 0, kind: input, shape index: {}]
  %s1 = inlined_call_operand.vmem [shape: s32[2,1,256], index: 1, kind: input, shape index: {}]
  %s2 = inlined_call_operand.vmem [shape: f32[2,1,256], index: 2, kind: output, shape index: {}]
  %s3 = sld [smem:[#allocation0]]
  $region41: #{_lambda_.2} parent=0
    _
  %s5 = ssub.s32 1, %s3
  %s6 = scalar_select 0, %s5, %s3
  loop: start=0, step=1, limit=4
  $region2: #{_lambda_.2} parent=0 // loop_pre_header
    _
  $region3: #{_lambda_.2} parent=0 // loop_header
    %s8 = sphi 0, %s12
    %p9 = scmp.ge.s32.totalorder %s8, 4
    %s15 = sphi 0, %s27
    %s16 = sphi 0, %s23
    %s17 = sphi 0, %s15
    %s18 = sphi 0, %s16
    %s19 = sphi 0, %s17
    %s20 = sphi 0, %s18
    %s32 = sphi 0, %s34
    %s35 = sphi 0, %s32
    %s36 = sphi 0, %s35
    %s52 = sphi 0, %s36
    %s60 = sphi 0, %s62
    %s63 = sphi 0, %s60
    %s64 = sphi 0, %s63
    %s80 = sphi 0, %s64
    %s88 = sphi 0, %s90
    %s91 = sphi 0, %s88
    %s92 = sphi 0, %s91
    %s108 = sphi 0, %s92
  $region4: #{_lambda_.2} parent=0 // loop_header_branch
    %11 = sbr.rel (%p9) target = $region8
  $region5: #{_lambda_.2} parent=0 // loop_body
    %s13 = ssub.s32 %s8, 1
    %s14 = ssub.s32 %s8, 2
    %s21 = sadd.s32 1, %s16
    %p22 = scmp.ge.s32.totalorder %s21, 1
    %s23 = scalar_select %p22, 0, %s21
    %s24 = sadd.s32 1, %s15
    %s25 = scalar_select %p22, %s24, %s15
    %p26 = scmp.ge.s32.totalorder %s25, 2
    %s27 = scalar_select %p26, 0, %s25
    %s28 = ssub.s32 %s15, %s27
    %s29 = ssub.s32 %s16, %s23
    %s30 = sor.u32 %s28, %s29
    %p31 = scmp.eq.s32.totalorder %s30, 0
    %s33 = sadd.s32 %s32, 1
    %s34 = scalar_select %p31, %s32, %s33
    %p37 = pneg %p31
    %p38 = scmp.eq.s32.totalorder %s8, 1
    %p39 = por %p37, %p38
    %p40 = scmp.ne.s32.totalorder %s32, %s35
    %p41 = scmp.eq.s32.totalorder %s8, 0
    %p42 = por %p40, %p41
    %p43 = scmp.ne.s32.totalorder %s32, %s35
    %p44 = scmp.eq.s32.totalorder %s13, 1
    %p45 = por %p43, %p44
    %p46 = scmp.ne.s32.totalorder %s35, %s36
    %p47 = scmp.eq.s32.totalorder %s13, 0
    %p48 = por %p46, %p47
    %p49 = scmp.ne.s32.totalorder %s35, %s36
    %p50 = scmp.eq.s32.totalorder %s14, 1
    %p51 = por %p49, %p50
    %p53 = scmp.ne.s32.totalorder %s36, %s52
    %p54 = scmp.eq.s32.totalorder %s14, 0
    %p55 = por %p53, %p54
    %s56 = ssub.s32 %s15, %s27
    %s57 = ssub.s32 %s16, %s23
    %s58 = sor.u32 %s56, %s57
    %p59 = scmp.eq.s32.totalorder %s58, 0
    %s61 = sadd.s32 %s60, 1
    %s62 = scalar_select %p59, %s60, %s61
    %p65 = pneg %p59
    %p66 = scmp.eq.s32.totalorder %s8, 1
    %p67 = por %p65, %p66
    %p68 = scmp.ne.s32.totalorder %s60, %s63
    %p69 = scmp.eq.s32.totalorder %s8, 0
    %p70 = por %p68, %p69
    %p71 = scmp.ne.s32.totalorder %s60, %s63
    %p72 = scmp.eq.s32.totalorder %s13, 1
    %p73 = por %p71, %p72
    %p74 = scmp.ne.s32.totalorder %s63, %s64
    %p75 = scmp.eq.s32.totalorder %s13, 0
    %p76 = por %p74, %p75
    %p77 = scmp.ne.s32.totalorder %s63, %s64
    %p78 = scmp.eq.s32.totalorder %s14, 1
    %p79 = por %p77, %p78
    %p81 = scmp.ne.s32.totalorder %s64, %s80
    %p82 = scmp.eq.s32.totalorder %s14, 0
    %p83 = por %p81, %p82
    %s84 = ssub.s32 %s15, %s27
    %s85 = ssub.s32 %s16, %s23
    %s86 = sor.u32 %s84, %s85
    %p87 = scmp.eq.s32.totalorder %s86, 0
    %s89 = sadd.s32 %s88, 1
    %s90 = scalar_select %p87, %s88, %s89
    %p93 = pneg %p87
    %p94 = scmp.eq.s32.totalorder %s8, 1
    %p95 = por %p93, %p94
    %p96 = scmp.ne.s32.totalorder %s88, %s91
    %p97 = scmp.eq.s32.totalorder %s8, 0
    %p98 = por %p96, %p97
    %p99 = scmp.ne.s32.totalorder %s88, %s91
    %p100 = scmp.eq.s32.totalorder %s13, 1
    %p101 = por %p99, %p100
    %p102 = scmp.ne.s32.totalorder %s91, %s92
    %p103 = scmp.eq.s32.totalorder %s13, 0
    %p104 = por %p102, %p103
    %p105 = scmp.ne.s32.totalorder %s91, %s92
    %p106 = scmp.eq.s32.totalorder %s14, 1
    %p107 = por %p105, %p106
    %p109 = scmp.ne.s32.totalorder %s92, %s108
    %p110 = scmp.eq.s32.totalorder %s14, 0
    %p111 = por %p109, %p110
    %p112 = scmp.le.s32.totalorder 1, %s8
    %p113 = scmp.lt.s32.totalorder %s8, 3
    %p114 = pnand %p112, %p113
    %p115 = pneg %p114
    // Predicated region
    $region9: #{_lambda_.2} parent=5 // pred_check
      _
    $region10: #{_lambda_.2} parent=5 // pred_check_branch
      %117 = sbr.rel (%p114) target = $region12
    $region11: #{_lambda_.2} parent=5 // pred_region
      %s118 = ssub.s32 %s8, 1
    $region12: #{_lambda_.2} parent=5 // pred_fallthru
      _
    %p119 = scmp.lt.s32.totalorder %s8, 2
    // Predicated region
    $region13: #{_lambda_.2} parent=5 // pred_check
      %p120 = pneg %p119
    $region14: #{_lambda_.2} parent=5 // pred_check_branch
      %122 = sbr.rel (%p120) target = $region16
    $region15: #{_lambda_.2} parent=5 // pred_region
      // Predicated region
      $region17: #{_lambda_.2} parent=15 // pred_check
        %p123 = pneg %p42
      $region18: #{_lambda_.2} parent=15 // pred_check_branch
        %125 = sbr.rel (%p123) target = $region20
      $region19: #{_lambda_.2} parent=15 // pred_region
        %s126 = smul.u32 2, %s16
        %p127 = scmp.lt.s32.totalorder %s15, 1
        %s128 = scalar_select %p127, %s15, 1
        %p129 = scmp.lt.s32.totalorder %s126, 1
        %s130 = scalar_select %p129, %s126, 1
        %s131 = smul.addr %s128, 2
        %s132 = sadd.s32 %s130, %s131
        %s133 = smul.addr %s132, 4
        %s134 = scalar_lea.vmem %s0, %s133
        %s135 = smul.u32 2, %s16
      $region20: #{_lambda_.2} parent=15 // pred_fallthru
        _
      // Predicated region
      $region21: #{_lambda_.2} parent=15 // pred_check
        %p136 = pneg %p70
      $region22: #{_lambda_.2} parent=15 // pred_check_branch
        %138 = sbr.rel (%p136) target = $region24
      $region23: #{_lambda_.2} parent=15 // pred_region
        %s139 = smul.u32 2, %s16
        %p140 = scmp.lt.s32.totalorder %s15, 1
        %s141 = scalar_select %p140, %s15, 1
        %p142 = scmp.lt.s32.totalorder %s139, 1
        %s143 = scalar_select %p142, %s139, 1
        %s144 = smul.addr %s141, 2
        %s145 = sadd.s32 %s143, %s144
        %s146 = scalar_lea.vmem %s1, %s145
        %s147 = smul.u32 2, %s16
      $region24: #{_lambda_.2} parent=15 // pred_fallthru
        _
    $region16: #{_lambda_.2} parent=5 // pred_fallthru
      _
    %p148 = scmp.le.s32.totalorder 1, %s8
    %p149 = scmp.lt.s32.totalorder %s8, 3
    %p150 = pnand %p148, %p149
    %p151 = pneg %p150
    // Predicated region
    $region25: #{_lambda_.2} parent=5 // pred_check
      _
    $region26: #{_lambda_.2} parent=5 // pred_check_branch
      %153 = sbr.rel (%p150) target = $region28
    $region27: #{_lambda_.2} parent=5 // pred_region
      %s154 = ssub.s32 %s8, 1
      %s155 = smul.u32 2, %s18
      %p156 = scmp.lt.s32.totalorder %s17, 1
      %s157 = scalar_select %p156, %s17, 1
      %p158 = scmp.lt.s32.totalorder %s155, 1
      %s159 = scalar_select %p158, %s155, 1
      %s160 = smul.addr %s157, 2
      %s161 = sadd.s32 %s159, %s160
      %s162 = smul.addr %s161, 4
      %s163 = scalar_lea.vmem %s0, %s162
      %p164 = pneg %p48
      %p165 = pneg %p45
      %s166 = smul.u32 2, %s18
      %p167 = scmp.lt.s32.totalorder %s17, 1
      %s168 = scalar_select %p167, %s17, 1
      %p169 = scmp.lt.s32.totalorder %s166, 1
      %s170 = scalar_select %p169, %s166, 1
      %s171 = smul.addr %s168, 2
      %s172 = sadd.s32 %s170, %s171
      %s173 = scalar_lea.vmem %s1, %s172
      %p174 = pneg %p76
      %p175 = pneg %p73
      %p176 = pneg %p104
      %p177 = pneg %p101
      %s178 = smul.u32 2, %s18
      %p179 = scmp.lt.s32.totalorder %s17, 1
      %s180 = scalar_select %p179, %s17, 1
      %p181 = scmp.lt.s32.totalorder %s178, 1
      %s182 = scalar_select %p181, %s178, 1
      %s183 = smul.addr %s180, 2
      %s184 = sadd.s32 %s182, %s183
      %s185 = scalar_lea.vmem %s2, %s184
      %s186 = smul.u32 2, %s18
      %p187 = scmp.lt.s32.totalorder %s17, 1
      %s188 = scalar_select %p187, %s17, 1
      %p189 = scmp.lt.s32.totalorder %s186, 1
      %s190 = scalar_select %p189, %s186, 1
      %s191 = smul.addr %s188, 2
      %s192 = sadd.s32 %s190, %s191
      %s193 = smul.addr %s192, 4
      %s194 = scalar_lea.vmem %s0, %s193
      %s195 = smul.u32 2, %s18
      %s196 = smul.u32 2, %s18
      %p197 = scmp.lt.s32.totalorder %s17, 1
      %s198 = scalar_select %p197, %s17, 1
      %p199 = scmp.lt.s32.totalorder %s196, 1
      %s200 = scalar_select %p199, %s196, 1
      %s201 = smul.addr %s198, 2
      %s202 = sadd.s32 %s200, %s201
      %s203 = scalar_lea.vmem %s1, %s202
      %s204 = smul.u32 2, %s18
      %s205 = smul.u32 2, %s18
      %p206 = scmp.lt.s32.totalorder %s17, 1
      %s207 = scalar_select %p206, %s17, 1
      %p208 = scmp.lt.s32.totalorder %s205, 1
      %s209 = scalar_select %p208, %s205, 1
      %s210 = smul.addr %s207, 2
      %s211 = sadd.s32 %s209, %s210
      %s212 = scalar_lea.vmem %s2, %s211
      %s213 = smul.u32 2, %s18
      %v214 = vld [vmem:[%s194] sm:$0xff]
      %v215 = vld [vmem:[%s203] sm:$0x3]
      %s216 = smul.u32 %s18, 256
      %v217 = vlaneseq
      %v218 = vand.u32 %v217, 127
      %v219 = vadd.s32 %v218, 128
      %v220 = vstv %s216
      %v221 = vadd.s32 %v220, %v218
      %v222 = vadd.s32 %v220, %v219
      %vm223 = vcmp.ne.s32.totalorder %v215, 4294967295
      %vm224 = vcmp.lt.s32.totalorder %v221, 256
      %vm225 = vcmp.lt.s32.totalorder %v222, 256
      %v226 = vsel %vm224, 1, 0
      %v227 = vsel %vm225, 1, 0
      %v228 = vcombine.low %v226, %v227
      %v230 = vunpack.c.l.s4 1966171168
      %v231 = vunpack.c.0.s8 %v230
      %v232 = vlaneseq
      %v233 = vshrl.u32 %v232, 7
      %v234 = vsub.s32 %v231, %v233
      %v235 = vrot.slane %v228, %v234
      %v237 = vunpack.c.l.s4 1966171168
      %v238 = vunpack.c.0.s8 %v237
      %v239 = vlaneseq
      %v240 = vshrl.u32 %v239, 7
      %v241 = vsub.s32 %v238, %v240
      %v242 = vrot.slane %v235, %v241
      %vm243 = vcmp.ne.s32.totalorder %v242, 0
      %vm244 = vmand %vm223, %vm243
      %v245 = vsel %vm244, %v215, 0
      %v247 = vcombine.high %v214, %v214
      %vm249 = vcmask 1043456
      %v250 = vsel %vm249, %v214, -inf
      %v251 = vrot.slane %v250, 4
      %v252 = vmax.f32 %v250, %v251
      %v253 = vrot.slane %v252, 2
      %v254 = vmax.f32 %v252, %v253
      %v255 = vrot.slane %v254, 1
      %v256 = vmax.f32 %v254, %v255
      %v257 = vsel %vm249, %v247, -inf
      %v258 = vrot.slane %v257, 4
      %v259 = vmax.f32 %v257, %v258
      %v260 = vrot.slane %v259, 2
      %v261 = vmax.f32 %v259, %v260
      %v262 = vrot.slane %v261, 1
      %v263 = vmax.f32 %v261, %v262
      %v266 = vcombine.low %v256, %v263
      %v268 = vsub.f32 %v214, %v266
      %v269 = vmul.f32 %v268, 1.442695
      %v270 = vpow.pop %v269
      %v272 = vcombine.high %v270, %v270
      %v274 = vsel %vm249, %v270, 0.0
      %v275 = vrot.slane %v274, 4
      %v276 = vadd.f32 %v274, %v275
      %v277 = vrot.slane %v276, 2
      %v278 = vadd.f32 %v276, %v277
      %v279 = vrot.slane %v278, 1
      %v280 = vadd.f32 %v278, %v279
      %v281 = vsel %vm249, %v272, 0.0
      %v282 = vrot.slane %v281, 4
      %v283 = vadd.f32 %v281, %v282
      %v284 = vrot.slane %v283, 2
      %v285 = vadd.f32 %v283, %v284
      %v286 = vrot.slane %v285, 1
      %v287 = vadd.f32 %v285, %v286
      %v288 = vlog2.pop %v280
      %v289 = vmul.f32 %v288, 0.6931472
      %v290 = vlog2.pop %v287
      %v291 = vmul.f32 %v290, 0.6931472
      %v292 = vlaneseq
      %v293 = vshrl.u32 %v292, 7
      %v294 = vlaneseq
      %v295 = vshrl.u32 %v294, 7
      %v296 = vsub.s32 0, %v295
      %v297 = vrot.slane %v245, %v296
      %v298 = vlaneseq
      %v299 = vshrl.u32 %v298, 7
      %v300 = vsub.s32 1, %v299
      %v301 = vrot.slane %v245, %v300
      %vm302 = vcmp.eq.s32.totalorder %v293, %v297
      %vm303 = vcmp.eq.s32.totalorder %v293, %v301
      %v305 = vcombine.high %v268, %v268
      %v307 = vsel %vm302, %v268, 0.0
      %v308 = vsel %vm303, %v305, 0.0
      %v309 = vsel %vm249, %v307, 0.0
      %v310 = vrot.slane %v309, 4
      %v311 = vadd.f32 %v309, %v310
      %v312 = vrot.slane %v311, 2
      %v313 = vadd.f32 %v311, %v312
      %v314 = vrot.slane %v313, 1
      %v315 = vadd.f32 %v313, %v314
      %v316 = vsel %vm249, %v308, 0.0
      %v317 = vrot.slane %v316, 4
      %v318 = vadd.f32 %v316, %v317
      %v319 = vrot.slane %v318, 2
      %v320 = vadd.f32 %v318, %v319
      %v321 = vrot.slane %v320, 1
      %v322 = vadd.f32 %v320, %v321
      %v323 = vsub.f32 %v315, %v289
      %v324 = vsub.f32 %v322, %v291
      %v325 = vmul.f32 %v323, 1.442695
      %v326 = vpow.pop %v325
      %v327 = vmul.f32 %v324, 1.442695
      %v328 = vpow.pop %v327
      %v331 = vcombine.low %v326, %v328
      %v333 = vunpack.c.l.s4 1966171168
      %v334 = vunpack.c.0.s8 %v333
      %v335 = vlaneseq
      %v336 = vshrl.u32 %v335, 7
      %v337 = vsub.s32 %v334, %v336
      %v338 = vrot.slane %v331, %v337
      %v340 = vunpack.c.l.s4 1966171168
      %v341 = vunpack.c.0.s8 %v340
      %v342 = vlaneseq
      %v343 = vshrl.u32 %v342, 7
      %v344 = vsub.s32 %v341, %v343
      %v345 = vrot.slane %v338, %v344
      %v347 = vsel %vm244, %v345, 2.0
      %v348 = vlaneseq
      %vm349 = vcmp.ge.s32.totalorder %v348, 0
      %vm350 = vcmp.lt.s32.totalorder %v348, 256
      %vm351 = vmand %vm349, %vm350
      %352 = vst.msk [vmem:[%s212] sm:$0x3] %vm351, %v347
      %s353 = smul.u32 2, %s18
      %p354 = scmp.lt.s32.totalorder %s17, 1
      %s355 = scalar_select %p354, %s17, 1
      %p356 = scmp.lt.s32.totalorder %s353, 1
      %s357 = scalar_select %p356, %s353, 1
      %s358 = smul.addr %s355, 2
      %s359 = sadd.s32 %s357, %s358
      %s360 = scalar_lea.vmem %s2, %s359
      // Predicated region
      $region29: #{_lambda_.2} parent=27 // pred_check
        %p361 = pneg %p101
      $region30: #{_lambda_.2} parent=27 // pred_check_branch
        %363 = sbr.rel (%p361) target = $region32
      $region31: #{_lambda_.2} parent=27 // pred_region
        %s364 = smul.u32 2, %s18
      $region32: #{_lambda_.2} parent=27 // pred_fallthru
        _
    $region28: #{_lambda_.2} parent=5 // pred_fallthru
      _
    %p365 = scmp.le.s32.totalorder 2, %s8
    // Predicated region
    $region33: #{_lambda_.2} parent=5 // pred_check
      %p366 = pneg %p365
    $region34: #{_lambda_.2} parent=5 // pred_check_branch
      %368 = sbr.rel (%p366) target = $region36
    $region35: #{_lambda_.2} parent=5 // pred_region
      %s369 = ssub.s32 %s8, 2
      // Predicated region
      $region37: #{_lambda_.2} parent=35 // pred_check
        %p370 = pneg %p107
      $region38: #{_lambda_.2} parent=35 // pred_check_branch
        %372 = sbr.rel (%p370) target = $region40
      $region39: #{_lambda_.2} parent=35 // pred_region
        %s373 = smul.u32 2, %s20
        %p374 = scmp.lt.s32.totalorder %s19, 1
        %s375 = scalar_select %p374, %s19, 1
        %p376 = scmp.lt.s32.totalorder %s373, 1
        %s377 = scalar_select %p376, %s373, 1
        %s378 = smul.addr %s375, 2
        %s379 = sadd.s32 %s377, %s378
        %s380 = scalar_lea.vmem %s2, %s379
      $region40: #{_lambda_.2} parent=35 // pred_fallthru
        _
    $region36: #{_lambda_.2} parent=5 // pred_fallthru
      _
  $region6: #{_lambda_.2} parent=0 // loop_footer
    %s12 = sadd.s32 1, %s8
  $region7: #{_lambda_.2} parent=0 // loop_footer_branch
    %7 = sbr.rel target = $region3
  $region8: #{_lambda_.2} parent=0 // loop_exit
    _

// kernel: _lambda_.3
$region0: #{_lambda_.3}
  #allocation0 [shape = 'u32[]', space=smem, size = 0x4, offset = 0x4, fixed_abs, tag = 'smem constant byte address 0x4 - core index']
  #allocation1 [shape = 'u32[144,128]{1,0:T(1,128)}', space=vmem, size = 0x12000, scoped, tag = 'internal scratch']
  %s0 = inlined_call_operand.vmem [shape: f32[4,128], index: 0, kind: input, shape index: {}]
  %s1 = inlined_call_operand.vmem [shape: f32[1,1,128], index: 1, kind: output, shape index: {0}]
  %s2 = inlined_call_operand.vmem [shape: f32[1,1,128], index: 2, kind: output, shape index: {1}]
  %s3 = inlined_call_operand.vmem [shape: f32[1,1,128], index: 3, kind: output, shape index: {2}]
  %s4 = inlined_call_operand.vmem [shape: f32[1,1,128], index: 4, kind: output, shape index: {3}]
  %5 = xla_tuple %s1, %s2, %s3, %s4
  %s6 = sld [smem:[#allocation0]]
  $region38: #{_lambda_.3} parent=0
    _
  %s8 = ssub.s32 1, %s6
  %s9 = scalar_select 0, %s8, %s6
  // Predicated region
  $region2: #{_lambda_.3} parent=0 // pred_check
    _
  $region3: #{_lambda_.3} parent=0 // pred_check_branch
    %11 = sbr.rel (0) target = $region5
  $region4: #{_lambda_.3} parent=0 // pred_region
    _
  $region5: #{_lambda_.3} parent=0 // pred_fallthru
    _
  %v12 = vld [vmem:[%s0] sm:$0xf]
  %s13 = smul.u32 0, 4
  %v14 = vlaneseq
  %v15 = vshrl.u32 %v14, 7
  %v16 = vstv %s13
  %v17 = vadd.s32 %v16, %v15
  %vm18 = vcmp.lt.s32.totalorder %v17, 4
  %vm19 = vcmp.lt.f32.partialorder %v12, 0.7
  %vm20 = vmand %vm18, %vm19
  %vm21 = vcmp.le.f32.partialorder %v12, 0.7
  %vm22 = vmand %vm18, %vm21
  %vm23 = vcmp.le.f32.partialorder %v12, 1.5
  %vm24 = vmand %vm18, %vm23
  %v25 = vmax.f32 %v12, 1.1754944e-38
  %v26 = vlog2.pop %v25
  %v27 = vmul.f32 %v26, 0.6931472
  %v28 = vsub.f32 0.0, %v27
  %v29 = vsel %vm20, %v28, 0.0
  %vm30 = vcmask 1043456
  %v31 = vsel %vm30, %v29, 0.0
  %v32 = vrot.slane %v31, 4
  %v33 = vadd.f32 %v31, %v32
  %v34 = vrot.slane %v33, 2
  %v35 = vadd.f32 %v33, %v34
  %v36 = vrot.slane %v35, 1
  %v37 = vadd.f32 %v35, %v36
  %38 = vst [vmem:[%s1] sm:$0x1] %v37
  %v39 = vsel %vm20, 1, 0
  %v40 = vcvt.s32.f32 %v39
  %v41 = vsel %vm30, %v40, 0.0
  %v42 = vrot.slane %v41, 4
  %v43 = vadd.f32 %v41, %v42
  %v44 = vrot.slane %v43, 2
  %v45 = vadd.f32 %v43, %v44
  %v46 = vrot.slane %v45, 1
  %v47 = vadd.f32 %v45, %v46
  %48 = vst [vmem:[%s2] sm:$0x1] %v47
  %v49 = vsel %vm22, 1, 0
  %v50 = vcvt.s32.f32 %v49
  %v51 = vsel %vm30, %v50, 0.0
  %v52 = vrot.slane %v51, 4
  %v53 = vadd.f32 %v51, %v52
  %v54 = vrot.slane %v53, 2
  %v55 = vadd.f32 %v53, %v54
  %v56 = vrot.slane %v55, 1
  %v57 = vadd.f32 %v55, %v56
  %58 = vst [vmem:[%s3] sm:$0x1] %v57
  %v59 = vsel %vm24, 1, 0
  %v60 = vcvt.s32.f32 %v59
  %v61 = vsel %vm30, %v60, 0.0
  %v62 = vrot.slane %v61, 4
  %v63 = vadd.f32 %v61, %v62
  %v64 = vrot.slane %v63, 2
  %v65 = vadd.f32 %v63, %v64
  %v66 = vrot.slane %v65, 1
  %v67 = vadd.f32 %v65, %v66
  %68 = vst [vmem:[%s4] sm:$0x1] %v67
  // Predicated region
  $region6: #{_lambda_.3} parent=0 // pred_check
    _
  $region7: #{_lambda_.3} parent=0 // pred_check_branch
    %70 = sbr.rel (0) target = $region9
  $region8: #{_lambda_.3} parent=0 // pred_region
    _
  $region9: #{_lambda_.3} parent=0 // pred_fallthru
    _
  // Predicated region
  $region10: #{_lambda_.3} parent=0 // pred_check
    _
  $region11: #{_lambda_.3} parent=0 // pred_check_branch
    %72 = sbr.rel (0) target = $region13
  $region12: #{_lambda_.3} parent=0 // pred_region
    _
  $region13: #{_lambda_.3} parent=0 // pred_fallthru
    _
  // Predicated region
  $region14: #{_lambda_.3} parent=0 // pred_check
    _
  $region15: #{_lambda_.3} parent=0 // pred_check_branch
    %74 = sbr.rel (0) target = $region17
  $region16: #{_lambda_.3} parent=0 // pred_region
    _
  $region17: #{_lambda_.3} parent=0 // pred_fallthru
    _
  // Predicated region
  $region18: #{_lambda_.3} parent=0 // pred_check
    _
  $region19: #{_lambda_.3} parent=0 // pred_check_branch
    %76 = sbr.rel (0) target = $region21
  $region20: #{_lambda_.3} parent=0 // pred_region
    _
  $region21: #{_lambda_.3} parent=0 // pred_fallthru
    _
  // Predicated region
  $region22: #{_lambda_.3} parent=0 // pred_check
    _
  $region23: #{_lambda_.3} parent=0 // pred_check_branch
    %78 = sbr.rel (0) target = $region25
  $region24: #{_lambda_.3} parent=0 // pred_region
    _
  $region25: #{_lambda_.3} parent=0 // pred_fallthru
    _
  // Predicated region
  $region26: #{_lambda_.3} parent=0 // pred_check
    _
  $region27: #{_lambda_.3} parent=0 // pred_check_branch
    %80 = sbr.rel (0) target = $region29
  $region28: #{_lambda_.3} parent=0 // pred_region
    _
  $region29: #{_lambda_.3} parent=0 // pred_fallthru
    _
  // Predicated region
  $region30: #{_lambda_.3} parent=0 // pred_check
    _
  $region31: #{_lambda_.3} parent=0 // pred_check_branch
    %82 = sbr.rel (0) target = $region33
  $region32: #{_lambda_.3} parent=0 // pred_region
    _
  $region33: #{_lambda_.3} parent=0 // pred_fallthru
    _
  // Predicated region
  $region34: #{_lambda_.3} parent=0 // pred_check
    _
  $region35: #{_lambda_.3} parent=0 // pred_check_branch
    %84 = sbr.rel (0) target = $region37
  $region36: #{_lambda_.3} parent=0 // pred_region
    _
  $region37: #{_lambda_.3} parent=0 // pred_fallthru
    _

</llo_original>
